<compile_context>
chip_gen: v5e
topology: v5e:2x2
jax: 0.10.0
libtpu: 0.0.40
codegen_flags: <defaults>
</compile_context>

<pallas_src>
import functools

import jax
import jax.numpy as jnp
from jax.experimental import pallas as pl
from jax.experimental.pallas import tpu as pltpu


def mlp_kernel(x_ref, w1_ref, b1_ref, w2_ref, b2_ref, w3_ref, b3_ref, o_ref):
    """Fused 3-layer MLP forward for one batch tile (bf16 MXU, f32 accumulate)."""
    x = x_ref[...].astype(jnp.bfloat16)

    # Layer 1: Linear + ReLU   (K = n_states, N = hidden)
    h1 = jnp.dot(x, w1_ref[...], preferred_element_type=jnp.float32) + b1_ref[...]
    h1 = jnp.maximum(h1, 0.0).astype(jnp.bfloat16)

    # Layer 2: Linear + ReLU   (K = hidden, N = hidden)
    h2 = jnp.dot(h1, w2_ref[...], preferred_element_type=jnp.float32) + b2_ref[...]
    h2 = jnp.maximum(h2, 0.0).astype(jnp.bfloat16)

    # Layer 3: Linear (narrow output, written directly -- no lane padding)
    out = jnp.dot(h2, w3_ref[...], preferred_element_type=jnp.float32) + b3_ref[...]
    o_ref[...] = out.astype(o_ref.dtype)


def _batch_tile(B: int, block_b: int) -> int:
    """Pick the batch tile: multiple of 8, >=2 grid steps when possible."""
    if B <= 8:
        return B
    # Cap at ceil(B/2) rounded up to 8 -> at least 2 grid steps, so both
    # TensorCores on v7x get work via the "parallel" axis.
    half_up = ((-(-B // 2) + 7) // 8) * 8
    bb = min(block_b, half_up)
    bb = max(8, (bb // 8) * 8)
    return bb


@functools.partial(jax.jit, static_argnames=("block_b",))
def mlp_forward(x, w1, b1, w2, b2, w3, b3, *, block_b=2048):
    """Run the fused MLP kernel, tiling over the batch dimension.

    Weights are [in_features, out_features] (i.e. PyTorch W.T); biases are
    [1, out_features].  Returns [B, n_actions] in x.dtype.
    """
    B, n_states = x.shape
    hidden = w1.shape[1]
    n_actions = w3.shape[1]

    # Weights in bf16 (x is cast inside the kernel); biases stay f32.
    w1b = w1.astype(jnp.bfloat16)
    w2b = w2.astype(jnp.bfloat16)
    w3b = w3.astype(jnp.bfloat16)

    bb = _batch_tile(B, block_b)
    grid = (pl.cdiv(B, bb),)

    # Advisory cost: lets XLA schedule/overlap around this short, mem-bound call.
    flops = 2 * B * (n_states * hidden + hidden * hidden + hidden * n_actions)
    bytes_accessed = (
        B * n_states * x.dtype.itemsize                  # activations in
        + (w1b.size + w2b.size + w3b.size) * 2           # bf16 weights
        + (b1.size + b2.size + b3.size) * 4              # f32 biases
        + B * n_actions * x.dtype.itemsize               # output
    )
    cost = pl.CostEstimate(flops=flops, transcendentals=0,
                           bytes_accessed=bytes_accessed)

    return pl.pallas_call(
        mlp_kernel,
        out_shape=jax.ShapeDtypeStruct((B, n_actions), x.dtype),
        grid_spec=pltpu.PrefetchScalarGridSpec(
            num_scalar_prefetch=0,
            grid=grid,
            in_specs=[
                # activations: tile over batch (last dim == full array dim)
                pl.BlockSpec((bb, n_states), lambda i: (i, 0)),
                # weights / biases: constant index_map -> stay resident in VMEM
                pl.BlockSpec((n_states, hidden), lambda i: (0, 0)),
                pl.BlockSpec((1, hidden), lambda i: (0, 0)),
                pl.BlockSpec((hidden, hidden), lambda i: (0, 0)),
                pl.BlockSpec((1, hidden), lambda i: (0, 0)),
                pl.BlockSpec((hidden, n_actions), lambda i: (0, 0)),
                pl.BlockSpec((1, n_actions), lambda i: (0, 0)),
            ],
            # narrow output, block covers the full last dim -> no padding,
            # no post-call slice
            out_specs=pl.BlockSpec((bb, n_actions), lambda i: (i, 0)),
        ),
        compiler_params=pltpu.CompilerParams(
            dimension_semantics=("parallel",),
            vmem_limit_bytes=64 << 20,
        ),
        cost_estimate=cost,
    )(x, w1b, b1, w2b, b2, w3b, b3)


def init_linear_params(key, fan_in, fan_out, dtype=jnp.float32):
    """Init mimicking torch.nn.Linear defaults (uniform +/- 1/sqrt(fan_in)).

    Returns weight already transposed to [in_features, out_features].
    """
    kw, kb = jax.random.split(key)
    bound = 1.0 / jnp.sqrt(fan_in)
    w_t = jax.random.uniform(kw, (fan_in, fan_out), dtype, minval=-bound, maxval=bound)
    b = jax.random.uniform(kb, (1, fan_out), dtype, minval=-bound, maxval=bound)
    return w_t, b


def reference_mlp_f32(x, w1, b1, w2, b2, w3, b3):
    """Pure f32 reference (matches the original torch module numerics)."""
    h1 = jnp.maximum(x @ w1 + b1, 0.0)
    h2 = jnp.maximum(h1 @ w2 + b2, 0.0)
    return h2 @ w3 + b3


def reference_mlp_matched(x, w1, b1, w2, b2, w3, b3):
    """Reference with the same bf16-operand / f32-accumulate precision as the kernel."""
    xb = x.astype(jnp.bfloat16)
    h1 = jnp.dot(xb, w1.astype(jnp.bfloat16), preferred_element_type=jnp.float32) + b1
    h1 = jnp.maximum(h1, 0.0).astype(jnp.bfloat16)
    h2 = jnp.dot(h1, w2.astype(jnp.bfloat16), preferred_element_type=jnp.float32) + b2
    h2 = jnp.maximum(h2, 0.0).astype(jnp.bfloat16)
    return jnp.dot(h2, w3.astype(jnp.bfloat16), preferred_element_type=jnp.float32) + b3


if __name__ == "__main__":
    n_states = 8
    n_actions = 4
    hidden = 128
    batch = 256   # small demo batch; tile cap -> 2 parallel grid steps of 128

    key = jax.random.PRNGKey(0)
    k_x, k1, k2, k3 = jax.random.split(key, 4)

    x = jax.random.normal(k_x, (batch, n_states), jnp.float32)
    w1, b1 = init_linear_params(k1, n_states, hidden)
    w2, b2 = init_linear_params(k2, hidden, hidden)
    w3, b3 = init_linear_params(k3, hidden, n_actions)

    out = mlp_forward(x, w1, b1, w2, b2, w3, b3)
    out = jax.block_until_ready(out)

    assert out.shape == (batch, n_actions)

    # Precision-matched reference: should agree very tightly.
    ref_m = reference_mlp_matched(x, w1, b1, w2, b2, w3, b3)
    assert jnp.allclose(out, ref_m, atol=2e-3, rtol=2e-3)

    # Full-f32 reference: agreement up to bf16 matmul rounding.
    ref_f32 = reference_mlp_f32(x, w1, b1, w2, b2, w3, b3)
    assert jnp.allclose(out, ref_f32, atol=1e-1, rtol=1e-1)

    print("KERNEL_OK")
</pallas_src>

<mosaic_0001>
module attributes {stable_mosaic.version = 11 : i64} {
  func.func @mlp_kernel(%arg0: i32, %arg1: memref<128x8xf32, #tpu.memory_space<vmem>>, %arg2: memref<8x128xbf16, #tpu.memory_space<vmem>>, %arg3: memref<1x128xf32, #tpu.memory_space<vmem>>, %arg4: memref<128x128xbf16, #tpu.memory_space<vmem>>, %arg5: memref<1x128xf32, #tpu.memory_space<vmem>>, %arg6: memref<128x4xbf16, #tpu.memory_space<vmem>>, %arg7: memref<1x4xf32, #tpu.memory_space<vmem>>, %arg8: memref<128x4xf32, #tpu.memory_space<vmem>>) attributes {dimension_semantics = [#tpu.dimension_semantics<parallel>], iteration_bounds = array<i64: 2>, scalar_prefetch = 0 : i64, scratch_operands = 0 : i64, tpu.core_type = #tpu.core_type<tc>, window_params = [{transform_indices = @transform_0, window_bounds = array<i64: 128, 8>}, {pipeline_mode = #tpu.pipeline_mode<synchronous>, transform_indices = @transform_1, window_bounds = array<i64: 8, 128>}, {pipeline_mode = #tpu.pipeline_mode<synchronous>, transform_indices = @transform_2, window_bounds = array<i64: 1, 128>}, {pipeline_mode = #tpu.pipeline_mode<synchronous>, transform_indices = @transform_3, window_bounds = array<i64: 128, 128>}, {pipeline_mode = #tpu.pipeline_mode<synchronous>, transform_indices = @transform_4, window_bounds = array<i64: 1, 128>}, {pipeline_mode = #tpu.pipeline_mode<synchronous>, transform_indices = @transform_5, window_bounds = array<i64: 128, 4>}, {pipeline_mode = #tpu.pipeline_mode<synchronous>, transform_indices = @transform_6, window_bounds = array<i64: 1, 4>}, {transform_indices = @transform_7, window_bounds = array<i64: 128, 4>}]} {
    %c0 = arith.constant 0 : index
    %c0_0 = arith.constant 0 : index
    %0 = vector.load %arg1[%c0, %c0_0] : memref<128x8xf32, #tpu.memory_space<vmem>>, vector<128x8xf32>
    %1 = arith.truncf %0 : vector<128x8xf32> to vector<128x8xbf16>
    %c0_1 = arith.constant 0 : index
    %c0_2 = arith.constant 0 : index
    %2 = vector.load %arg2[%c0_1, %c0_2] : memref<8x128xbf16, #tpu.memory_space<vmem>>, vector<8x128xbf16>
    %cst = arith.constant dense<0.000000e+00> : vector<128x128xf32>
    %3 = tpu.matmul %1, %2, %cst {dimension_numbers = #tpu.dot_dimension_numbers<[1], [0], [0], [1], [0, 0, 1, 1], [], []>} : vector<128x8xbf16>, vector<8x128xbf16>, vector<128x128xf32> -> vector<128x128xf32>
    %c0_3 = arith.constant 0 : index
    %c0_4 = arith.constant 0 : index
    %4 = vector.load %arg3[%c0_3, %c0_4] : memref<1x128xf32, #tpu.memory_space<vmem>>, vector<1x128xf32>
    %5 = vector.broadcast %4 : vector<1x128xf32> to vector<128x128xf32>
    %6 = arith.addf %3, %5 : vector<128x128xf32>
    %cst_5 = arith.constant 0.000000e+00 : f32
    %7 = vector.broadcast %cst_5 : f32 to vector<128x128xf32>
    %8 = arith.maximumf %6, %7 : vector<128x128xf32>
    %9 = arith.truncf %8 : vector<128x128xf32> to vector<128x128xbf16>
    %c0_6 = arith.constant 0 : index
    %c0_7 = arith.constant 0 : index
    %10 = vector.load %arg4[%c0_6, %c0_7] : memref<128x128xbf16, #tpu.memory_space<vmem>>, vector<128x128xbf16>
    %cst_8 = arith.constant dense<0.000000e+00> : vector<128x128xf32>
    %11 = tpu.matmul %9, %10, %cst_8 {dimension_numbers = #tpu.dot_dimension_numbers<[1], [0], [0], [1], [0, 0, 1, 1], [], []>} : vector<128x128xbf16>, vector<128x128xbf16>, vector<128x128xf32> -> vector<128x128xf32>
    %c0_9 = arith.constant 0 : index
    %c0_10 = arith.constant 0 : index
    %12 = vector.load %arg5[%c0_9, %c0_10] : memref<1x128xf32, #tpu.memory_space<vmem>>, vector<1x128xf32>
    %13 = vector.broadcast %12 : vector<1x128xf32> to vector<128x128xf32>
    %14 = arith.addf %11, %13 : vector<128x128xf32>
    %cst_11 = arith.constant 0.000000e+00 : f32
    %15 = vector.broadcast %cst_11 : f32 to vector<128x128xf32>
    %16 = arith.maximumf %14, %15 : vector<128x128xf32>
    %17 = arith.truncf %16 : vector<128x128xf32> to vector<128x128xbf16>
    %c0_12 = arith.constant 0 : index
    %c0_13 = arith.constant 0 : index
    %18 = vector.load %arg6[%c0_12, %c0_13] : memref<128x4xbf16, #tpu.memory_space<vmem>>, vector<128x4xbf16>
    %cst_14 = arith.constant dense<0.000000e+00> : vector<128x4xf32>
    %19 = tpu.matmul %17, %18, %cst_14 {dimension_numbers = #tpu.dot_dimension_numbers<[1], [0], [0], [1], [0, 0, 1, 1], [], []>} : vector<128x128xbf16>, vector<128x4xbf16>, vector<128x4xf32> -> vector<128x4xf32>
    %c0_15 = arith.constant 0 : index
    %c0_16 = arith.constant 0 : index
    %20 = vector.load %arg7[%c0_15, %c0_16] : memref<1x4xf32, #tpu.memory_space<vmem>>, vector<1x4xf32>
    %21 = vector.broadcast %20 : vector<1x4xf32> to vector<128x4xf32>
    %22 = arith.addf %19, %21 : vector<128x4xf32>
    %c0_17 = arith.constant 0 : index
    %c0_18 = arith.constant 0 : index
    %23 = vector.load %arg8[%c0_17, %c0_18] : memref<128x4xf32, #tpu.memory_space<vmem>>, vector<128x4xf32>
    tpu.vector_store %arg8[%c0_17, %c0_18], %22 {strides = array<i32>} : memref<128x4xf32, #tpu.memory_space<vmem>>, vector<128x4xf32>,
    return
  }
  func.func @transform_0(%arg0: i32) -> (i32, i32) {
    %c0_i32 = arith.constant 0 : i32
    %c0_i32_0 = arith.constant 0 : i32
    return %arg0, %c0_i32 : i32, i32
  }
  func.func @transform_1(%arg0: i32) -> (i32, i32) {
    %c0_i32 = arith.constant 0 : i32
    %c0_i32_0 = arith.constant 0 : i32
    %c0_i32_1 = arith.constant 0 : i32
    return %c0_i32, %c0_i32_0 : i32, i32
  }
  func.func @transform_2(%arg0: i32) -> (i32, i32) {
    %c0_i32 = arith.constant 0 : i32
    %c0_i32_0 = arith.constant 0 : i32
    %c0_i32_1 = arith.constant 0 : i32
    return %c0_i32, %c0_i32_0 : i32, i32
  }
  func.func @transform_3(%arg0: i32) -> (i32, i32) {
    %c0_i32 = arith.constant 0 : i32
    %c0_i32_0 = arith.constant 0 : i32
    %c0_i32_1 = arith.constant 0 : i32
    return %c0_i32, %c0_i32_0 : i32, i32
  }
  func.func @transform_4(%arg0: i32) -> (i32, i32) {
    %c0_i32 = arith.constant 0 : i32
    %c0_i32_0 = arith.constant 0 : i32
    %c0_i32_1 = arith.constant 0 : i32
    return %c0_i32, %c0_i32_0 : i32, i32
  }
  func.func @transform_5(%arg0: i32) -> (i32, i32) {
    %c0_i32 = arith.constant 0 : i32
    %c0_i32_0 = arith.constant 0 : i32
    %c0_i32_1 = arith.constant 0 : i32
    return %c0_i32, %c0_i32_0 : i32, i32
  }
  func.func @transform_6(%arg0: i32) -> (i32, i32) {
    %c0_i32 = arith.constant 0 : i32
    %c0_i32_0 = arith.constant 0 : i32
    %c0_i32_1 = arith.constant 0 : i32
    return %c0_i32, %c0_i32_0 : i32, i32
  }
  func.func @transform_7(%arg0: i32) -> (i32, i32) {
    %c0_i32 = arith.constant 0 : i32
    %c0_i32_0 = arith.constant 0 : i32
    return %arg0, %c0_i32 : i32, i32
  }
}

</mosaic_0001>

<llo_original>
// kernel: mlp_forward.1
$region0: #{mlp_forward.1}
  #allocation0 [shape = 'u32[]', space=smem, size = 0x4, offset = 0x4, fixed_abs, tag = 'smem constant byte address 0x4 - core index']
  #allocation1 [shape = 'u32[72,128]{1,0:T(1,128)}', space=vmem, size = 0x9000, scoped, tag = 'internal scratch']
  %s0 = inlined_call_operand.vmem [shape: f32[256,8], index: 0, kind: input, shape index: {}]
  %s1 = inlined_call_operand.vmem [shape: bf16[8,128], index: 1, kind: input, shape index: {}]
  %s2 = inlined_call_operand.vmem [shape: f32[1,128], index: 2, kind: input, shape index: {}]
  %s3 = inlined_call_operand.vmem [shape: bf16[128,128], index: 3, kind: input, shape index: {}]
  %s4 = inlined_call_operand.vmem [shape: f32[1,128], index: 4, kind: input, shape index: {}]
  %s5 = inlined_call_operand.vmem [shape: bf16[128,4], index: 5, kind: input, shape index: {}]
  %s6 = inlined_call_operand.vmem [shape: f32[1,4], index: 6, kind: input, shape index: {}]
  %s7 = inlined_call_operand.vmem [shape: f32[256,4], index: 7, kind: output, shape index: {}]
  %s8 = sld [smem:[#allocation0]]
  $region61: #{mlp_forward.1} parent=0
    _
  %s10 = ssub.s32 1, %s8
  %s11 = scalar_select 0, %s10, %s8
  loop: start=0, step=1, limit=4
  $region2: #{mlp_forward.1} parent=0 // loop_pre_header
    _
  $region3: #{mlp_forward.1} parent=0 // loop_header
    %s13 = sphi 0, %s17
    %p14 = scmp.ge.s32.totalorder %s13, 4
    %s23 = sphi 0, %s25
    %s26 = sphi 0, %s23
    %s27 = sphi 0, %s26
    %s43 = sphi 0, %s27
    %s47 = sphi 0, %s47
    %s49 = sphi 0, %s47
    %s50 = sphi 0, %s49
    %s64 = sphi 0, %s50
    %s68 = sphi 0, %s68
    %s70 = sphi 0, %s68
    %s71 = sphi 0, %s70
    %s85 = sphi 0, %s71
    %s89 = sphi 0, %s89
    %s91 = sphi 0, %s89
    %s92 = sphi 0, %s91
    %s106 = sphi 0, %s92
    %s110 = sphi 0, %s110
    %s112 = sphi 0, %s110
    %s113 = sphi 0, %s112
    %s127 = sphi 0, %s113
    %s131 = sphi 0, %s131
    %s133 = sphi 0, %s131
    %s134 = sphi 0, %s133
    %s148 = sphi 0, %s134
    %s152 = sphi 0, %s152
    %s154 = sphi 0, %s152
    %s155 = sphi 0, %s154
    %s169 = sphi 0, %s155
    %s175 = sphi 0, %s177
    %s178 = sphi 0, %s175
    %s179 = sphi 0, %s178
    %s195 = sphi 0, %s179
  $region4: #{mlp_forward.1} parent=0 // loop_header_branch
    %16 = sbr.rel (%p14) target = $region8
  $region5: #{mlp_forward.1} parent=0 // loop_body
    %s18 = ssub.s32 %s13, 1
    %s19 = ssub.s32 %s13, 2
    %s20 = sadd.s32 %s13, 1
    %s21 = ssub.s32 %s13, %s20
    %p22 = scmp.eq.s32.totalorder %s21, 0
    %s24 = sadd.s32 %s23, 1
    %s25 = scalar_select %p22, %s23, %s24
    %p28 = pneg %p22
    %p29 = scmp.eq.s32.totalorder %s13, 1
    %p30 = por %p28, %p29
    %p31 = scmp.ne.s32.totalorder %s23, %s26
    %p32 = scmp.eq.s32.totalorder %s13, 0
    %p33 = por %p31, %p32
    %p34 = scmp.ne.s32.totalorder %s23, %s26
    %p35 = scmp.eq.s32.totalorder %s18, 1
    %p36 = por %p34, %p35
    %p37 = scmp.ne.s32.totalorder %s26, %s27
    %p38 = scmp.eq.s32.totalorder %s18, 0
    %p39 = por %p37, %p38
    %p40 = scmp.ne.s32.totalorder %s26, %s27
    %p41 = scmp.eq.s32.totalorder %s19, 1
    %p42 = por %p40, %p41
    %p44 = scmp.ne.s32.totalorder %s27, %s43
    %p45 = scmp.eq.s32.totalorder %s19, 0
    %p46 = por %p44, %p45
    %s48 = sadd.s32 %s47, 1
    %p51 = scmp.eq.s32.totalorder %s13, 1
    %p52 = scmp.ne.s32.totalorder %s47, %s49
    %p53 = scmp.eq.s32.totalorder %s13, 0
    %p54 = por %p52, %p53
    %p55 = scmp.ne.s32.totalorder %s47, %s49
    %p56 = scmp.eq.s32.totalorder %s18, 1
    %p57 = por %p55, %p56
    %p58 = scmp.ne.s32.totalorder %s49, %s50
    %p59 = scmp.eq.s32.totalorder %s18, 0
    %p60 = por %p58, %p59
    %p61 = scmp.ne.s32.totalorder %s49, %s50
    %p62 = scmp.eq.s32.totalorder %s19, 1
    %p63 = por %p61, %p62
    %p65 = scmp.ne.s32.totalorder %s50, %s64
    %p66 = scmp.eq.s32.totalorder %s19, 0
    %p67 = por %p65, %p66
    %s69 = sadd.s32 %s68, 1
    %p72 = scmp.eq.s32.totalorder %s13, 1
    %p73 = scmp.ne.s32.totalorder %s68, %s70
    %p74 = scmp.eq.s32.totalorder %s13, 0
    %p75 = por %p73, %p74
    %p76 = scmp.ne.s32.totalorder %s68, %s70
    %p77 = scmp.eq.s32.totalorder %s18, 1
    %p78 = por %p76, %p77
    %p79 = scmp.ne.s32.totalorder %s70, %s71
    %p80 = scmp.eq.s32.totalorder %s18, 0
    %p81 = por %p79, %p80
    %p82 = scmp.ne.s32.totalorder %s70, %s71
    %p83 = scmp.eq.s32.totalorder %s19, 1
    %p84 = por %p82, %p83
    %p86 = scmp.ne.s32.totalorder %s71, %s85
    %p87 = scmp.eq.s32.totalorder %s19, 0
    %p88 = por %p86, %p87
    %s90 = sadd.s32 %s89, 1
    %p93 = scmp.eq.s32.totalorder %s13, 1
    %p94 = scmp.ne.s32.totalorder %s89, %s91
    %p95 = scmp.eq.s32.totalorder %s13, 0
    %p96 = por %p94, %p95
    %p97 = scmp.ne.s32.totalorder %s89, %s91
    %p98 = scmp.eq.s32.totalorder %s18, 1
    %p99 = por %p97, %p98
    %p100 = scmp.ne.s32.totalorder %s91, %s92
    %p101 = scmp.eq.s32.totalorder %s18, 0
    %p102 = por %p100, %p101
    %p103 = scmp.ne.s32.totalorder %s91, %s92
    %p104 = scmp.eq.s32.totalorder %s19, 1
    %p105 = por %p103, %p104
    %p107 = scmp.ne.s32.totalorder %s92, %s106
    %p108 = scmp.eq.s32.totalorder %s19, 0
    %p109 = por %p107, %p108
    %s111 = sadd.s32 %s110, 1
    %p114 = scmp.eq.s32.totalorder %s13, 1
    %p115 = scmp.ne.s32.totalorder %s110, %s112
    %p116 = scmp.eq.s32.totalorder %s13, 0
    %p117 = por %p115, %p116
    %p118 = scmp.ne.s32.totalorder %s110, %s112
    %p119 = scmp.eq.s32.totalorder %s18, 1
    %p120 = por %p118, %p119
    %p121 = scmp.ne.s32.totalorder %s112, %s113
    %p122 = scmp.eq.s32.totalorder %s18, 0
    %p123 = por %p121, %p122
    %p124 = scmp.ne.s32.totalorder %s112, %s113
    %p125 = scmp.eq.s32.totalorder %s19, 1
    %p126 = por %p124, %p125
    %p128 = scmp.ne.s32.totalorder %s113, %s127
    %p129 = scmp.eq.s32.totalorder %s19, 0
    %p130 = por %p128, %p129
    %s132 = sadd.s32 %s131, 1
    %p135 = scmp.eq.s32.totalorder %s13, 1
    %p136 = scmp.ne.s32.totalorder %s131, %s133
    %p137 = scmp.eq.s32.totalorder %s13, 0
    %p138 = por %p136, %p137
    %p139 = scmp.ne.s32.totalorder %s131, %s133
    %p140 = scmp.eq.s32.totalorder %s18, 1
    %p141 = por %p139, %p140
    %p142 = scmp.ne.s32.totalorder %s133, %s134
    %p143 = scmp.eq.s32.totalorder %s18, 0
    %p144 = por %p142, %p143
    %p145 = scmp.ne.s32.totalorder %s133, %s134
    %p146 = scmp.eq.s32.totalorder %s19, 1
    %p147 = por %p145, %p146
    %p149 = scmp.ne.s32.totalorder %s134, %s148
    %p150 = scmp.eq.s32.totalorder %s19, 0
    %p151 = por %p149, %p150
    %s153 = sadd.s32 %s152, 1
    %p156 = scmp.eq.s32.totalorder %s13, 1
    %p157 = scmp.ne.s32.totalorder %s152, %s154
    %p158 = scmp.eq.s32.totalorder %s13, 0
    %p159 = por %p157, %p158
    %p160 = scmp.ne.s32.totalorder %s152, %s154
    %p161 = scmp.eq.s32.totalorder %s18, 1
    %p162 = por %p160, %p161
    %p163 = scmp.ne.s32.totalorder %s154, %s155
    %p164 = scmp.eq.s32.totalorder %s18, 0
    %p165 = por %p163, %p164
    %p166 = scmp.ne.s32.totalorder %s154, %s155
    %p167 = scmp.eq.s32.totalorder %s19, 1
    %p168 = por %p166, %p167
    %p170 = scmp.ne.s32.totalorder %s155, %s169
    %p171 = scmp.eq.s32.totalorder %s19, 0
    %p172 = por %p170, %p171
    %s173 = ssub.s32 %s13, %s20
    %p174 = scmp.eq.s32.totalorder %s173, 0
    %s176 = sadd.s32 %s175, 1
    %s177 = scalar_select %p174, %s175, %s176
    %p180 = pneg %p174
    %p181 = scmp.eq.s32.totalorder %s13, 1
    %p182 = por %p180, %p181
    %p183 = scmp.ne.s32.totalorder %s175, %s178
    %p184 = scmp.eq.s32.totalorder %s13, 0
    %p185 = por %p183, %p184
    %p186 = scmp.ne.s32.totalorder %s175, %s178
    %p187 = scmp.eq.s32.totalorder %s18, 1
    %p188 = por %p186, %p187
    %p189 = scmp.ne.s32.totalorder %s178, %s179
    %p190 = scmp.eq.s32.totalorder %s18, 0
    %p191 = por %p189, %p190
    %p192 = scmp.ne.s32.totalorder %s178, %s179
    %p193 = scmp.eq.s32.totalorder %s19, 1
    %p194 = por %p192, %p193
    %p196 = scmp.ne.s32.totalorder %s179, %s195
    %p197 = scmp.eq.s32.totalorder %s19, 0
    %p198 = por %p196, %p197
    %p199 = scmp.le.s32.totalorder 1, %s13
    %p200 = scmp.lt.s32.totalorder %s13, 3
    %p201 = pnand %p199, %p200
    %p202 = pneg %p201
    // Predicated region
    $region9: #{mlp_forward.1} parent=5 // pred_check
      _
    $region10: #{mlp_forward.1} parent=5 // pred_check_branch
      %204 = sbr.rel (%p201) target = $region12
    $region11: #{mlp_forward.1} parent=5 // pred_region
      %s205 = ssub.s32 %s13, 1
      // Predicated region
      $region13: #{mlp_forward.1} parent=11 // pred_check
        %p206 = pneg %p60
      $region14: #{mlp_forward.1} parent=11 // pred_check_branch
        %208 = sbr.rel (%p206) target = $region16
      $region15: #{mlp_forward.1} parent=11 // pred_region
        _
      $region16: #{mlp_forward.1} parent=11 // pred_fallthru
        _
      // Predicated region
      $region17: #{mlp_forward.1} parent=11 // pred_check
        %p209 = pneg %p81
      $region18: #{mlp_forward.1} parent=11 // pred_check_branch
        %211 = sbr.rel (%p209) target = $region20
      $region19: #{mlp_forward.1} parent=11 // pred_region
        _
      $region20: #{mlp_forward.1} parent=11 // pred_fallthru
        _
      // Predicated region
      $region21: #{mlp_forward.1} parent=11 // pred_check
        %p212 = pneg %p102
      $region22: #{mlp_forward.1} parent=11 // pred_check_branch
        %214 = sbr.rel (%p212) target = $region24
      $region23: #{mlp_forward.1} parent=11 // pred_region
        _
      $region24: #{mlp_forward.1} parent=11 // pred_fallthru
        _
      // Predicated region
      $region25: #{mlp_forward.1} parent=11 // pred_check
        %p215 = pneg %p123
      $region26: #{mlp_forward.1} parent=11 // pred_check_branch
        %217 = sbr.rel (%p215) target = $region28
      $region27: #{mlp_forward.1} parent=11 // pred_region
        _
      $region28: #{mlp_forward.1} parent=11 // pred_fallthru
        _
      // Predicated region
      $region29: #{mlp_forward.1} parent=11 // pred_check
        %p218 = pneg %p144
      $region30: #{mlp_forward.1} parent=11 // pred_check_branch
        %220 = sbr.rel (%p218) target = $region32
      $region31: #{mlp_forward.1} parent=11 // pred_region
        _
      $region32: #{mlp_forward.1} parent=11 // pred_fallthru
        _
      // Predicated region
      $region33: #{mlp_forward.1} parent=11 // pred_check
        %p221 = pneg %p165
      $region34: #{mlp_forward.1} parent=11 // pred_check_branch
        %223 = sbr.rel (%p221) target = $region36
      $region35: #{mlp_forward.1} parent=11 // pred_region
        _
      $region36: #{mlp_forward.1} parent=11 // pred_fallthru
        _
    $region12: #{mlp_forward.1} parent=5 // pred_fallthru
      _
    %p224 = scmp.lt.s32.totalorder %s13, 2
    // Predicated region
    $region37: #{mlp_forward.1} parent=5 // pred_check
      %p225 = pneg %p224
    $region38: #{mlp_forward.1} parent=5 // pred_check_branch
      %227 = sbr.rel (%p225) target = $region40
    $region39: #{mlp_forward.1} parent=5 // pred_region
      // Predicated region
      $region41: #{mlp_forward.1} parent=39 // pred_check
        %p228 = pneg %p33
      $region42: #{mlp_forward.1} parent=39 // pred_check_branch
        %230 = sbr.rel (%p228) target = $region44
      $region43: #{mlp_forward.1} parent=39 // pred_region
        %s231 = smul.u32 16, %s13
        %p232 = scmp.lt.s32.totalorder %s231, 31
        %s233 = scalar_select %p232, %s231, 31
        %s234 = smul.addr %s233, 8
        %s235 = scalar_lea.vmem %s0, %s234
        %s236 = smul.u32 16, %s13
      $region44: #{mlp_forward.1} parent=39 // pred_fallthru
        _
    $region40: #{mlp_forward.1} parent=5 // pred_fallthru
      _
    %p237 = scmp.le.s32.totalorder 1, %s13
    %p238 = scmp.lt.s32.totalorder %s13, 3
    %p239 = pnand %p237, %p238
    %p240 = pneg %p239
    // Predicated region
    $region45: #{mlp_forward.1} parent=5 // pred_check
      _
    $region46: #{mlp_forward.1} parent=5 // pred_check_branch
      %242 = sbr.rel (%p239) target = $region48
    $region47: #{mlp_forward.1} parent=5 // pred_region
      %s243 = ssub.s32 %s13, 1
      %s244 = smul.u32 16, %s18
      %p245 = scmp.lt.s32.totalorder %s244, 31
      %s246 = scalar_select %p245, %s244, 31
      %s247 = smul.addr %s246, 8
      %s248 = scalar_lea.vmem %s0, %s247
      %p249 = pneg %p39
      %p250 = pneg %p36
      %p251 = pneg %p60
      %p252 = pneg %p57
      %p253 = pneg %p81
      %p254 = pneg %p78
      %p255 = pneg %p102
      %p256 = pneg %p99
      %p257 = pneg %p123
      %p258 = pneg %p120
      %p259 = pneg %p144
      %p260 = pneg %p141
      %p261 = pneg %p165
      %p262 = pneg %p162
      %p263 = pneg %p191
      %p264 = pneg %p188
      %s265 = smul.u32 16, %s18
      %p266 = scmp.lt.s32.totalorder %s265, 31
      %s267 = scalar_select %p266, %s265, 31
      %s268 = smul.addr %s267, 8
      %s269 = scalar_lea.vmem %s7, %s268
      %s270 = smul.u32 16, %s18
      %p271 = scmp.lt.s32.totalorder %s270, 31
      %s272 = scalar_select %p271, %s270, 31
      %s273 = smul.addr %s272, 8
      %s274 = scalar_lea.vmem %s0, %s273
      %s275 = smul.u32 16, %s18
      %s276 = smul.u32 16, %s18
      %p277 = scmp.lt.s32.totalorder %s276, 31
      %s278 = scalar_select %p277, %s276, 31
      %s279 = smul.addr %s278, 8
      %s280 = scalar_lea.vmem %s7, %s279
      %s281 = smul.u32 16, %s18
      %v283 = vld [vmem:[%s274] sm:$0xff]
      %v284 = vld [vmem:[%s274 + $0x8] sm:$0xff]
      %v285 = vld [vmem:[%s274 + $0x10] sm:$0xff]
      %v286 = vld [vmem:[%s274 + $0x18] sm:$0xff]
      %v287 = vld [vmem:[%s274 + $0x20] sm:$0xff]
      %v288 = vld [vmem:[%s274 + $0x28] sm:$0xff]
      %v289 = vld [vmem:[%s274 + $0x30] sm:$0xff]
      %v290 = vld [vmem:[%s274 + $0x38] sm:$0xff]
      %v291 = vld [vmem:[%s274 + $0x40] sm:$0xff]
      %v292 = vld [vmem:[%s274 + $0x48] sm:$0xff]
      %v293 = vld [vmem:[%s274 + $0x50] sm:$0xff]
      %v294 = vld [vmem:[%s274 + $0x58] sm:$0xff]
      %v295 = vld [vmem:[%s274 + $0x60] sm:$0xff]
      %v296 = vld [vmem:[%s274 + $0x68] sm:$0xff]
      %v297 = vld [vmem:[%s274 + $0x70] sm:$0xff]
      %v298 = vld [vmem:[%s274 + $0x78] sm:$0xff]
      %v299 = vpack.c.bf16 %v284, %v283
      %v300 = vpack.c.bf16 %v286, %v285
      %v301 = vpack.c.bf16 %v288, %v287
      %v302 = vpack.c.bf16 %v290, %v289
      %v303 = vpack.c.bf16 %v292, %v291
      %v304 = vpack.c.bf16 %v294, %v293
      %v305 = vpack.c.bf16 %v296, %v295
      %v306 = vpack.c.bf16 %v298, %v297
      %v307 = vld [vmem:[%s1] sm:$0xf]
      %v308 = vld [vmem:[%s2] sm:$0x1]
      %v310 = vperm.slane %v308, 0
      %vm312 = vcmask 64512
      %v314 = vsel %vm312, %v299, 0
      %v317 = vsel %vm312, %v300, 0
      %v320 = vsel %vm312, %v301, 0
      %v323 = vsel %vm312, %v302, 0
      %v326 = vsel %vm312, %v303, 0
      %v329 = vsel %vm312, %v304, 0
      %v332 = vsel %vm312, %v305, 0
      %v335 = vsel %vm312, %v306, 0
      %vm337 = vcmask 1043456
      %v339 = vsel %vm337, %v307, 0
      %341 = vmatpush.bf16.msra.mxu0 0
      %342 = vmatpush.bf16.msra.mxu0 0
      %343 = vmatpush.bf16.msra.mxu0 0
      %344 = vmatpush.bf16.msra.mxu0 0
      %345 = vmatpush.bf16.msra.mxu0 0
      %346 = vmatpush.bf16.msra.mxu0 0
      %347 = vmatpush.bf16.msra.mxu0 0
      %348 = vmatpush.bf16.msra.mxu0 %v339
      %349 = vmatmul.bf16.gmra.mxu0 %v314
      %v350 = vpop.f32.mrf.mxu0
      %v351 = vadd.f32 %v310, %v350
      %v352 = vpop.f32.mrf.mxu0
      %v353 = vadd.f32 %v310, %v352
      %354 = vmatmul.bf16.gmra.mxu0 %v317
      %v355 = vpop.f32.mrf.mxu0
      %v356 = vadd.f32 %v310, %v355
      %v357 = vpop.f32.mrf.mxu0
      %v358 = vadd.f32 %v310, %v357
      %359 = vmatmul.bf16.gmra.mxu0 %v320
      %v360 = vpop.f32.mrf.mxu0
      %v361 = vadd.f32 %v310, %v360
      %v362 = vpop.f32.mrf.mxu0
      %v363 = vadd.f32 %v310, %v362
      %364 = vmatmul.bf16.gmra.mxu0 %v323
      %v365 = vpop.f32.mrf.mxu0
      %v366 = vadd.f32 %v310, %v365
      %v367 = vpop.f32.mrf.mxu0
      %v368 = vadd.f32 %v310, %v367
      %369 = vmatmul.bf16.gmra.mxu0 %v326
      %v370 = vpop.f32.mrf.mxu0
      %v371 = vadd.f32 %v310, %v370
      %v372 = vpop.f32.mrf.mxu0
      %v373 = vadd.f32 %v310, %v372
      %374 = vmatmul.bf16.gmra.mxu0 %v329
      %v375 = vpop.f32.mrf.mxu0
      %v376 = vadd.f32 %v310, %v375
      %v377 = vpop.f32.mrf.mxu0
      %v378 = vadd.f32 %v310, %v377
      %379 = vmatmul.bf16.gmra.mxu0 %v332
      %v380 = vpop.f32.mrf.mxu0
      %v381 = vadd.f32 %v310, %v380
      %v382 = vpop.f32.mrf.mxu0
      %v383 = vadd.f32 %v310, %v382
      %384 = vmatmul.bf16.gmra.mxu0 %v335
      %v385 = vpop.f32.mrf.mxu0
      %v386 = vadd.f32 %v310, %v385
      %v387 = vpop.f32.mrf.mxu0
      %v388 = vadd.f32 %v310, %v387
      %389 = vdwg.mxu0
      %v390 = vmax.f32 %v351, 0.0
      %v391 = vmax.f32 %v353, 0.0
      %v392 = vmax.f32 %v356, 0.0
      %v393 = vmax.f32 %v358, 0.0
      %v394 = vmax.f32 %v361, 0.0
      %v395 = vmax.f32 %v363, 0.0
      %v396 = vmax.f32 %v366, 0.0
      %v397 = vmax.f32 %v368, 0.0
      %v398 = vmax.f32 %v371, 0.0
      %v399 = vmax.f32 %v373, 0.0
      %v400 = vmax.f32 %v376, 0.0
      %v401 = vmax.f32 %v378, 0.0
      %v402 = vmax.f32 %v381, 0.0
      %v403 = vmax.f32 %v383, 0.0
      %v404 = vmax.f32 %v386, 0.0
      %v405 = vmax.f32 %v388, 0.0
      %v406 = vpack.c.bf16 %v391, %v390
      %v407 = vpack.c.bf16 %v393, %v392
      %v408 = vpack.c.bf16 %v395, %v394
      %v409 = vpack.c.bf16 %v397, %v396
      %v410 = vpack.c.bf16 %v399, %v398
      %v411 = vpack.c.bf16 %v401, %v400
      %v412 = vpack.c.bf16 %v403, %v402
      %v413 = vpack.c.bf16 %v405, %v404
      %v414 = vld [vmem:[%s3] sm:$0xf]
      %v415 = vld [vmem:[%s3 + $0x4] sm:$0xf]
      %v416 = vld [vmem:[%s3 + $0x8] sm:$0xf]
      %v417 = vld [vmem:[%s3 + $0xc] sm:$0xf]
      %v418 = vld [vmem:[%s3 + $0x10] sm:$0xf]
      %v419 = vld [vmem:[%s3 + $0x14] sm:$0xf]
      %v420 = vld [vmem:[%s3 + $0x18] sm:$0xf]
      %v421 = vld [vmem:[%s3 + $0x1c] sm:$0xf]
      %v422 = vld [vmem:[%s3 + $0x20] sm:$0xf]
      %v423 = vld [vmem:[%s3 + $0x24] sm:$0xf]
      %v424 = vld [vmem:[%s3 + $0x28] sm:$0xf]
      %v425 = vld [vmem:[%s3 + $0x2c] sm:$0xf]
      %v426 = vld [vmem:[%s3 + $0x30] sm:$0xf]
      %v427 = vld [vmem:[%s3 + $0x34] sm:$0xf]
      %v428 = vld [vmem:[%s3 + $0x38] sm:$0xf]
      %v429 = vld [vmem:[%s3 + $0x3c] sm:$0xf]
      %v430 = vld [vmem:[%s4] sm:$0x1]
      %v432 = vperm.slane %v430, 0
      %v450 = vunpack.c.l.b16 %v414
      %v451 = vunpack.c.l.b16 %v415
      %v452 = vunpack.c.l.b16 %v416
      %v453 = vunpack.c.l.b16 %v417
      %v454 = vunpack.c.l.b16 %v418
      %v455 = vunpack.c.l.b16 %v419
      %v456 = vunpack.c.l.b16 %v420
      %v457 = vunpack.c.l.b16 %v421
      %v458 = vunpack.c.l.b16 %v422
      %v459 = vunpack.c.l.b16 %v423
      %v460 = vunpack.c.l.b16 %v424
      %v461 = vunpack.c.l.b16 %v425
      %v462 = vunpack.c.l.b16 %v426
      %v463 = vunpack.c.l.b16 %v427
      %v464 = vunpack.c.l.b16 %v428
      %v465 = vunpack.c.l.b16 %v429
      %v466 = vpack.c.b16 %v451, %v450
      %v467 = vpack.c.b16 %v453, %v452
      %v468 = vpack.c.b16 %v455, %v454
      %v469 = vpack.c.b16 %v457, %v456
      %v470 = vpack.c.b16 %v459, %v458
      %v471 = vpack.c.b16 %v461, %v460
      %v472 = vpack.c.b16 %v463, %v462
      %v473 = vpack.c.b16 %v465, %v464
      %482 = vmatpush.bf16.msra.mxu0 %v473
      %483 = vmatpush.bf16.msra.mxu0 %v472
      %484 = vmatpush.bf16.msra.mxu0 %v471
      %485 = vmatpush.bf16.msra.mxu0 %v470
      %486 = vmatpush.bf16.msra.mxu0 %v469
      %487 = vmatpush.bf16.msra.mxu0 %v468
      %488 = vmatpush.bf16.msra.mxu0 %v467
      %489 = vmatpush.bf16.msra.mxu0 %v466
      %490 = vmatmul.bf16.gmra.mxu0 %v406
      %v491 = vpop.f32.mrf.mxu0
      %v492 = vadd.f32 %v432, %v491
      %v493 = vpop.f32.mrf.mxu0
      %v494 = vadd.f32 %v432, %v493
      %495 = vmatmul.bf16.gmra.mxu0 %v407
      %v496 = vpop.f32.mrf.mxu0
      %v497 = vadd.f32 %v432, %v496
      %v498 = vpop.f32.mrf.mxu0
      %v499 = vadd.f32 %v432, %v498
      %500 = vmatmul.bf16.gmra.mxu0 %v408
      %v501 = vpop.f32.mrf.mxu0
      %v502 = vadd.f32 %v432, %v501
      %v503 = vpop.f32.mrf.mxu0
      %v504 = vadd.f32 %v432, %v503
      %505 = vmatmul.bf16.gmra.mxu0 %v409
      %v506 = vpop.f32.mrf.mxu0
      %v507 = vadd.f32 %v432, %v506
      %v508 = vpop.f32.mrf.mxu0
      %v509 = vadd.f32 %v432, %v508
      %510 = vmatmul.bf16.gmra.mxu0 %v410
      %v511 = vpop.f32.mrf.mxu0
      %v512 = vadd.f32 %v432, %v511
      %v513 = vpop.f32.mrf.mxu0
      %v514 = vadd.f32 %v432, %v513
      %515 = vmatmul.bf16.gmra.mxu0 %v411
      %v516 = vpop.f32.mrf.mxu0
      %v517 = vadd.f32 %v432, %v516
      %v518 = vpop.f32.mrf.mxu0
      %v519 = vadd.f32 %v432, %v518
      %520 = vmatmul.bf16.gmra.mxu0 %v412
      %v521 = vpop.f32.mrf.mxu0
      %v522 = vadd.f32 %v432, %v521
      %v523 = vpop.f32.mrf.mxu0
      %v524 = vadd.f32 %v432, %v523
      %525 = vmatmul.bf16.gmra.mxu0 %v413
      %v526 = vpop.f32.mrf.mxu0
      %v527 = vadd.f32 %v432, %v526
      %v528 = vpop.f32.mrf.mxu0
      %v529 = vadd.f32 %v432, %v528
      %530 = vdwg.mxu0
      %v531 = vmax.f32 %v492, 0.0
      %v532 = vmax.f32 %v494, 0.0
      %v533 = vmax.f32 %v497, 0.0
      %v534 = vmax.f32 %v499, 0.0
      %v535 = vmax.f32 %v502, 0.0
      %v536 = vmax.f32 %v504, 0.0
      %v537 = vmax.f32 %v507, 0.0
      %v538 = vmax.f32 %v509, 0.0
      %v539 = vmax.f32 %v512, 0.0
      %v540 = vmax.f32 %v514, 0.0
      %v541 = vmax.f32 %v517, 0.0
      %v542 = vmax.f32 %v519, 0.0
      %v543 = vmax.f32 %v522, 0.0
      %v544 = vmax.f32 %v524, 0.0
      %v545 = vmax.f32 %v527, 0.0
      %v546 = vmax.f32 %v529, 0.0
      %v547 = vpack.c.bf16 %v532, %v531
      %v548 = vpack.c.bf16 %v534, %v533
      %v549 = vpack.c.bf16 %v536, %v535
      %v550 = vpack.c.bf16 %v538, %v537
      %v551 = vpack.c.bf16 %v540, %v539
      %v552 = vpack.c.bf16 %v542, %v541
      %v553 = vpack.c.bf16 %v544, %v543
      %v554 = vpack.c.bf16 %v546, %v545
      %v555 = vld [vmem:[%s5] sm:$0xf]
      %v556 = vld [vmem:[%s5 + $0x4] sm:$0xf]
      %v557 = vld [vmem:[%s5 + $0x8] sm:$0xf]
      %v558 = vld [vmem:[%s5 + $0xc] sm:$0xf]
      %v559 = vld [vmem:[%s5 + $0x10] sm:$0xf]
      %v560 = vld [vmem:[%s5 + $0x14] sm:$0xf]
      %v561 = vld [vmem:[%s5 + $0x18] sm:$0xf]
      %v562 = vld [vmem:[%s5 + $0x1c] sm:$0xf]
      %v563 = vld [vmem:[%s5 + $0x20] sm:$0xf]
      %v564 = vld [vmem:[%s5 + $0x24] sm:$0xf]
      %v565 = vld [vmem:[%s5 + $0x28] sm:$0xf]
      %v566 = vld [vmem:[%s5 + $0x2c] sm:$0xf]
      %v567 = vld [vmem:[%s5 + $0x30] sm:$0xf]
      %v568 = vld [vmem:[%s5 + $0x34] sm:$0xf]
      %v569 = vld [vmem:[%s5 + $0x38] sm:$0xf]
      %v570 = vld [vmem:[%s5 + $0x3c] sm:$0xf]
      %v571 = vld [vmem:[%s6] sm:$0x1]
      %v573 = vperm.slane %v571, 0
      %v591 = vunpack.c.l.b16 %v555
      %v592 = vunpack.c.l.b16 %v556
      %v593 = vunpack.c.l.b16 %v557
      %v594 = vunpack.c.l.b16 %v558
      %v595 = vunpack.c.l.b16 %v559
      %v596 = vunpack.c.l.b16 %v560
      %v597 = vunpack.c.l.b16 %v561
      %v598 = vunpack.c.l.b16 %v562
      %v599 = vunpack.c.l.b16 %v563
      %v600 = vunpack.c.l.b16 %v564
      %v601 = vunpack.c.l.b16 %v565
      %v602 = vunpack.c.l.b16 %v566
      %v603 = vunpack.c.l.b16 %v567
      %v604 = vunpack.c.l.b16 %v568
      %v605 = vunpack.c.l.b16 %v569
      %v606 = vunpack.c.l.b16 %v570
      %v607 = vpack.c.b16 %v592, %v591
      %v608 = vpack.c.b16 %v594, %v593
      %v609 = vpack.c.b16 %v596, %v595
      %v610 = vpack.c.b16 %v598, %v597
      %v611 = vpack.c.b16 %v600, %v599
      %v612 = vpack.c.b16 %v602, %v601
      %v613 = vpack.c.b16 %v604, %v603
      %v614 = vpack.c.b16 %v606, %v605
      %623 = vmatpush.bf16.msra.mxu0 %v614
      %624 = vmatpush.bf16.msra.mxu0 %v613
      %625 = vmatpush.bf16.msra.mxu0 %v612
      %626 = vmatpush.bf16.msra.mxu0 %v611
      %627 = vmatpush.bf16.msra.mxu0 %v610
      %628 = vmatpush.bf16.msra.mxu0 %v609
      %629 = vmatpush.bf16.msra.mxu0 %v608
      %630 = vmatpush.bf16.msra.mxu0 %v607
      %631 = vmatmul.bf16.gmra.mxu0 %v547
      %v632 = vpop.f32.mrf.mxu0
      %v633 = vadd.f32 %v573, %v632
      %v634 = vpop.f32.mrf.mxu0
      %v635 = vadd.f32 %v573, %v634
      %636 = vmatmul.bf16.gmra.mxu0 %v548
      %v637 = vpop.f32.mrf.mxu0
      %v638 = vadd.f32 %v573, %v637
      %v639 = vpop.f32.mrf.mxu0
      %v640 = vadd.f32 %v573, %v639
      %641 = vmatmul.bf16.gmra.mxu0 %v549
      %v642 = vpop.f32.mrf.mxu0
      %v643 = vadd.f32 %v573, %v642
      %v644 = vpop.f32.mrf.mxu0
      %v645 = vadd.f32 %v573, %v644
      %646 = vmatmul.bf16.gmra.mxu0 %v550
      %v647 = vpop.f32.mrf.mxu0
      %v648 = vadd.f32 %v573, %v647
      %v649 = vpop.f32.mrf.mxu0
      %v650 = vadd.f32 %v573, %v649
      %651 = vmatmul.bf16.gmra.mxu0 %v551
      %v652 = vpop.f32.mrf.mxu0
      %v653 = vadd.f32 %v573, %v652
      %v654 = vpop.f32.mrf.mxu0
      %v655 = vadd.f32 %v573, %v654
      %656 = vmatmul.bf16.gmra.mxu0 %v552
      %v657 = vpop.f32.mrf.mxu0
      %v658 = vadd.f32 %v573, %v657
      %v659 = vpop.f32.mrf.mxu0
      %v660 = vadd.f32 %v573, %v659
      %661 = vmatmul.bf16.gmra.mxu0 %v553
      %v662 = vpop.f32.mrf.mxu0
      %v663 = vadd.f32 %v573, %v662
      %v664 = vpop.f32.mrf.mxu0
      %v665 = vadd.f32 %v573, %v664
      %666 = vmatmul.bf16.gmra.mxu0 %v554
      %v667 = vpop.f32.mrf.mxu0
      %v668 = vadd.f32 %v573, %v667
      %v669 = vpop.f32.mrf.mxu0
      %v670 = vadd.f32 %v573, %v669
      %671 = vdwg.mxu0
      %vm672 = vcmask 31744
      %673 = vst.msk [vmem:[%s280] sm:$0xff] %vm672, %v633
      %674 = vst.msk [vmem:[%s280 + $0x8] sm:$0xff] %vm672, %v635
      %675 = vst.msk [vmem:[%s280 + $0x10] sm:$0xff] %vm672, %v638
      %676 = vst.msk [vmem:[%s280 + $0x18] sm:$0xff] %vm672, %v640
      %677 = vst.msk [vmem:[%s280 + $0x20] sm:$0xff] %vm672, %v643
      %678 = vst.msk [vmem:[%s280 + $0x28] sm:$0xff] %vm672, %v645
      %679 = vst.msk [vmem:[%s280 + $0x30] sm:$0xff] %vm672, %v648
      %680 = vst.msk [vmem:[%s280 + $0x38] sm:$0xff] %vm672, %v650
      %681 = vst.msk [vmem:[%s280 + $0x40] sm:$0xff] %vm672, %v653
      %682 = vst.msk [vmem:[%s280 + $0x48] sm:$0xff] %vm672, %v655
      %683 = vst.msk [vmem:[%s280 + $0x50] sm:$0xff] %vm672, %v658
      %684 = vst.msk [vmem:[%s280 + $0x58] sm:$0xff] %vm672, %v660
      %685 = vst.msk [vmem:[%s280 + $0x60] sm:$0xff] %vm672, %v663
      %686 = vst.msk [vmem:[%s280 + $0x68] sm:$0xff] %vm672, %v665
      %687 = vst.msk [vmem:[%s280 + $0x70] sm:$0xff] %vm672, %v668
      %688 = vst.msk [vmem:[%s280 + $0x78] sm:$0xff] %vm672, %v670
      %s689 = smul.u32 16, %s18
      %p690 = scmp.lt.s32.totalorder %s689, 31
      %s691 = scalar_select %p690, %s689, 31
      %s692 = smul.addr %s691, 8
      %s693 = scalar_lea.vmem %s7, %s692
      // Predicated region
      $region49: #{mlp_forward.1} parent=47 // pred_check
        %p694 = pneg %p188
      $region50: #{mlp_forward.1} parent=47 // pred_check_branch
        %696 = sbr.rel (%p694) target = $region52
      $region51: #{mlp_forward.1} parent=47 // pred_region
        %s697 = smul.u32 16, %s18
      $region52: #{mlp_forward.1} parent=47 // pred_fallthru
        _
    $region48: #{mlp_forward.1} parent=5 // pred_fallthru
      _
    %p698 = scmp.le.s32.totalorder 2, %s13
    // Predicated region
    $region53: #{mlp_forward.1} parent=5 // pred_check
      %p699 = pneg %p698
    $region54: #{mlp_forward.1} parent=5 // pred_check_branch
      %701 = sbr.rel (%p699) target = $region56
    $region55: #{mlp_forward.1} parent=5 // pred_region
      %s702 = ssub.s32 %s13, 2
      // Predicated region
      $region57: #{mlp_forward.1} parent=55 // pred_check
        %p703 = pneg %p194
      $region58: #{mlp_forward.1} parent=55 // pred_check_branch
        %705 = sbr.rel (%p703) target = $region60
      $region59: #{mlp_forward.1} parent=55 // pred_region
        %s706 = smul.u32 16, %s19
        %p707 = scmp.lt.s32.totalorder %s706, 31
        %s708 = scalar_select %p707, %s706, 31
        %s709 = smul.addr %s708, 8
        %s710 = scalar_lea.vmem %s7, %s709
      $region60: #{mlp_forward.1} parent=55 // pred_fallthru
        _
    $region56: #{mlp_forward.1} parent=5 // pred_fallthru
      _
  $region6: #{mlp_forward.1} parent=0 // loop_footer
    %s17 = sadd.s32 1, %s13
  $region7: #{mlp_forward.1} parent=0 // loop_footer_branch
    %12 = sbr.rel target = $region3
  $region8: #{mlp_forward.1} parent=0 // loop_exit
    _

</llo_original>
